<compile_context>
chip_gen: v6e
topology: v6e:2x2x1
jax: 0.10.0
libtpu: 0.0.40
codegen_flags: <defaults>
</compile_context>

<pallas_src>
import functools
import math

import jax
import jax.numpy as jnp
from jax import lax
from jax.experimental import pallas as pl
from jax.experimental.pallas import tpu as pltpu


# ---------------------------------------------------------------------------
# Kernel
# ---------------------------------------------------------------------------
def _biasfree_ln_kernel(x_ref, a_ref, bw_ref, o_ref, *, eps):
    # x_ref: (TR, L) block, L = G*C lane-dense; each row holds G channel groups.
    x32 = x_ref[...].astype(jnp.float32)                                 # (TR, L)
    a = a_ref[...]                                                       # (L, G): segment mean (1/C inside group)
    # One-pass stats on the MXU: per-group mean and mean of squares.
    mean = jnp.dot(x32, a, preferred_element_type=jnp.float32)           # (TR, G)
    mean_sq = jnp.dot(x32 * x32, a, preferred_element_type=jnp.float32)  # (TR, G)
    var = jnp.maximum(mean_sq - mean * mean, 0.0)                        # unbiased=False, clamped
    inv = lax.rsqrt(var + eps)                                           # (TR, G), EUP
    # Broadcast per-group inv back to full lane width; weight is folded into bw.
    scale = jnp.dot(inv, bw_ref[...], preferred_element_type=jnp.float32)  # (TR, L)
    # BiasFree: no mean subtraction, no beta. Re-index x_ref so no block-sized
    # f32 temp has to stay live across the matmuls for sub-32-bit inputs.
    o_ref[...] = (x_ref[...].astype(jnp.float32) * scale).astype(o_ref.dtype)


# ---------------------------------------------------------------------------
# Wrapper
# ---------------------------------------------------------------------------
def _round_up(v, m):
    return ((v + m - 1) // m) * m


def biasfree_layernorm(x, weight, *, eps=1e-5, target_block_bytes=1536 * 1024):
    C = x.shape[-1]
    assert weight.shape == (C,)
    orig_shape = x.shape
    R = x.size // C                                  # number of normalized rows
    itemsize = jnp.dtype(x.dtype).itemsize
    sub = {4: 8, 2: 16, 1: 32}.get(itemsize, 8)      # dtype-aware sublane multiple

    # Fold G rows so the lane dim L = G*C is a multiple of 128 (lane-dense).
    G = math.lcm(C, 128) // C
    L = G * C

    xr = x.reshape(R, C)
    pad = (-R) % G
    if pad:
        # Zero-pad rows instead of degrading to a non-lane-dense layout.
        xr = jnp.pad(xr, ((0, pad), (0, 0)))
    Rp = R + pad
    Rg = Rp // G
    x2 = xr.reshape(Rg, L)                           # free: contiguous row-major reshape

    # Row-block size: ~target_block_bytes per input block, dtype-aware rounding,
    # and never let the grid collapse to a single step when there are enough rows.
    if Rg <= sub:
        tr = Rg                                      # full extent (allowed: equals array dim)
    else:
        rows_target = max(sub, (target_block_bytes // (L * itemsize)) // sub * sub)
        tr = min(rows_target, Rg)
        if Rg >= 4 * sub:
            tr = min(tr, _round_up(pl.cdiv(Rg, 4), sub))   # >= ~4 grid steps (v7x: 2 TCs)
        else:
            tr = min(tr, _round_up(pl.cdiv(Rg, 2), sub))   # >= 2 grid steps
        tr = max(sub, (tr // sub) * sub)
    grid = (pl.cdiv(Rg, tr),)

    # Tiny constant matrices for the segmented (per-channel-group) reduction.
    lane_grp = jnp.arange(L, dtype=jnp.int32) // C                       # group id of each lane
    grp = jnp.arange(G, dtype=jnp.int32)
    a_mat = (lane_grp[:, None] == grp[None, :]).astype(jnp.float32) / C  # (L, G): segment mean
    w_tiled = jnp.tile(weight.astype(jnp.float32), G)                    # (L,): weight per lane
    bw_mat = ((grp[:, None] == lane_grp[None, :]).astype(jnp.float32)
              * w_tiled[None, :])                                        # (G, L): broadcast-back * weight

    # VMEM accounting: double-buffered in/out blocks + in-kernel f32 temps + constants.
    blk_in = tr * L * itemsize
    blk_f32 = tr * L * 4
    const_b = 2 * L * G * 4
    vmem_est = 4 * blk_in + 4 * blk_f32 + const_b
    vmem_limit = int(min(max(2 * vmem_est, 16 * 1024 * 1024), 32 * 1024 * 1024))

    out = pl.pallas_call(
        functools.partial(_biasfree_ln_kernel, eps=eps),
        out_shape=jax.ShapeDtypeStruct((Rg, L), x.dtype),
        grid=grid,
        in_specs=[
            pl.BlockSpec((tr, L), lambda r: (r, 0)),     # x rows (lane-dense)
            pl.BlockSpec((L, G), lambda r: (0, 0)),      # A (resident constant)
            pl.BlockSpec((G, L), lambda r: (0, 0)),      # B * weight (resident constant)
        ],
        out_specs=pl.BlockSpec((tr, L), lambda r: (r, 0)),
        compiler_params=pltpu.CompilerParams(
            dimension_semantics=("parallel",),           # megacore sharding + pipelining over row blocks
            vmem_limit_bytes=vmem_limit,
        ),
    )(x2, a_mat, bw_mat)

    out = out.reshape(Rp, C)
    if pad:
        out = out[:R]
    return out.reshape(orig_shape)


# ---------------------------------------------------------------------------
# Pure-JAX reference (exact PyTorch BiasFree_LayerNorm math)
# ---------------------------------------------------------------------------
def biasfree_layernorm_ref(x, weight, eps=1e-5):
    xf = x.astype(jnp.float32)
    var = jnp.var(xf, axis=-1, keepdims=True)            # ddof=0 == unbiased=False
    return (xf / jnp.sqrt(var + eps) * weight).astype(x.dtype)


# ---------------------------------------------------------------------------
if __name__ == "__main__":
    key = jax.random.PRNGKey(0)
    kx, kw, kx2, kw2, kx3, kw3 = jax.random.split(key, 6)

    # Primary small shape: 4-D input, LayerNorm over the last dim (size 16).
    x = jax.random.normal(kx, (2, 4, 16, 16), dtype=jnp.float32)
    w = jax.random.uniform(kw, (16,), jnp.float32, 0.5, 1.5)
    out = jax.block_until_ready(biasfree_layernorm(x, w))
    ref = biasfree_layernorm_ref(x, w)
    assert out.shape == x.shape
    if not bool(jnp.allclose(out, ref, atol=1e-4, rtol=1e-4)):
        raise AssertionError("Pallas BiasFree_LayerNorm mismatches reference (primary shape)")

    # Second shape: C=48 (Restormer-style), multi-step pipelined "parallel" grid.
    x2 = jax.random.normal(kx2, (1, 64, 64, 48), dtype=jnp.float32)
    w2 = jax.random.uniform(kw2, (48,), jnp.float32, 0.5, 1.5)
    out2 = jax.block_until_ready(biasfree_layernorm(x2, w2))
    ref2 = biasfree_layernorm_ref(x2, w2)
    if not bool(jnp.allclose(out2, ref2, atol=1e-4, rtol=1e-4)):
        raise AssertionError("Pallas BiasFree_LayerNorm mismatches reference (tiled shape)")

    # Third shape: row count not divisible by G -> exercises the zero-padding
    # path and a partial last grid block.
    x3 = jax.random.normal(kx3, (1, 4, 25, 48), dtype=jnp.float32)
    w3 = jax.random.uniform(kw3, (48,), jnp.float32, 0.5, 1.5)
    out3 = jax.block_until_ready(biasfree_layernorm(x3, w3))
    ref3 = biasfree_layernorm_ref(x3, w3)
    if not bool(jnp.allclose(out3, ref3, atol=1e-4, rtol=1e-4)):
        raise AssertionError("Pallas BiasFree_LayerNorm mismatches reference (padded shape)")

    print("KERNEL_OK")
</pallas_src>

<mosaic_0001>
module attributes {stable_mosaic.version = 11 : i64} {
  func.func @_biasfree_ln_kernel(%arg0: i32, %arg1: memref<8x128xf32, #tpu.memory_space<vmem>>, %arg2: memref<128x8xf32, #tpu.memory_space<vmem>>, %arg3: memref<8x128xf32, #tpu.memory_space<vmem>>, %arg4: memref<8x128xf32, #tpu.memory_space<vmem>>) attributes {dimension_semantics = [#tpu.dimension_semantics<parallel>], iteration_bounds = array<i64: 2>, scalar_prefetch = 0 : i64, scratch_operands = 0 : i64, tpu.core_type = #tpu.core_type<tc>, window_params = [{transform_indices = @transform_0, window_bounds = array<i64: 8, 128>}, {pipeline_mode = #tpu.pipeline_mode<synchronous>, transform_indices = @transform_1, window_bounds = array<i64: 128, 8>}, {pipeline_mode = #tpu.pipeline_mode<synchronous>, transform_indices = @transform_2, window_bounds = array<i64: 8, 128>}, {transform_indices = @transform_3, window_bounds = array<i64: 8, 128>}]} {
    %c0 = arith.constant 0 : index
    %c0_0 = arith.constant 0 : index
    %0 = vector.load %arg1[%c0, %c0_0] : memref<8x128xf32, #tpu.memory_space<vmem>>, vector<8x128xf32>
    %c0_1 = arith.constant 0 : index
    %c0_2 = arith.constant 0 : index
    %1 = vector.load %arg2[%c0_1, %c0_2] : memref<128x8xf32, #tpu.memory_space<vmem>>, vector<128x8xf32>
    %cst = arith.constant dense<0.000000e+00> : vector<8x8xf32>
    %2 = tpu.matmul %0, %1, %cst {dimension_numbers = #tpu.dot_dimension_numbers<[1], [0], [0], [1], [0, 0, 1, 1], [], []>} : vector<8x128xf32>, vector<128x8xf32>, vector<8x8xf32> -> vector<8x8xf32>
    %3 = arith.mulf %0, %0 : vector<8x128xf32>
    %cst_3 = arith.constant dense<0.000000e+00> : vector<8x8xf32>
    %4 = tpu.matmul %3, %1, %cst_3 {dimension_numbers = #tpu.dot_dimension_numbers<[1], [0], [0], [1], [0, 0, 1, 1], [], []>} : vector<8x128xf32>, vector<128x8xf32>, vector<8x8xf32> -> vector<8x8xf32>
    %5 = arith.mulf %2, %2 : vector<8x8xf32>
    %6 = arith.subf %4, %5 : vector<8x8xf32>
    %cst_4 = arith.constant 0.000000e+00 : f32
    %7 = vector.broadcast %cst_4 : f32 to vector<8x8xf32>
    %8 = arith.maximumf %6, %7 : vector<8x8xf32>
    %cst_5 = arith.constant 9.99999974E-6 : f32
    %9 = vector.broadcast %cst_5 : f32 to vector<8x8xf32>
    %10 = arith.addf %8, %9 : vector<8x8xf32>
    %11 = math.rsqrt %10 : vector<8x8xf32>
    %c0_6 = arith.constant 0 : index
    %c0_7 = arith.constant 0 : index
    %12 = vector.load %arg3[%c0_6, %c0_7] : memref<8x128xf32, #tpu.memory_space<vmem>>, vector<8x128xf32>
    %cst_8 = arith.constant dense<0.000000e+00> : vector<8x128xf32>
    %13 = tpu.matmul %11, %12, %cst_8 {dimension_numbers = #tpu.dot_dimension_numbers<[1], [0], [0], [1], [0, 0, 1, 1], [], []>} : vector<8x8xf32>, vector<8x128xf32>, vector<8x128xf32> -> vector<8x128xf32>
    %c0_9 = arith.constant 0 : index
    %c0_10 = arith.constant 0 : index
    %14 = vector.load %arg1[%c0_9, %c0_10] : memref<8x128xf32, #tpu.memory_space<vmem>>, vector<8x128xf32>
    %15 = arith.mulf %14, %13 : vector<8x128xf32>
    %c0_11 = arith.constant 0 : index
    %c0_12 = arith.constant 0 : index
    %16 = vector.load %arg4[%c0_11, %c0_12] : memref<8x128xf32, #tpu.memory_space<vmem>>, vector<8x128xf32>
    tpu.vector_store %arg4[%c0_11, %c0_12], %15 {strides = array<i32>} : memref<8x128xf32, #tpu.memory_space<vmem>>, vector<8x128xf32>,
    return
  }
  func.func @transform_0(%arg0: i32) -> (i32, i32) {
    %c0_i32 = arith.constant 0 : i32
    %c0_i32_0 = arith.constant 0 : i32
    return %arg0, %c0_i32 : i32, i32
  }
  func.func @transform_1(%arg0: i32) -> (i32, i32) {
    %c0_i32 = arith.constant 0 : i32
    %c0_i32_0 = arith.constant 0 : i32
    %c0_i32_1 = arith.constant 0 : i32
    return %c0_i32, %c0_i32_0 : i32, i32
  }
  func.func @transform_2(%arg0: i32) -> (i32, i32) {
    %c0_i32 = arith.constant 0 : i32
    %c0_i32_0 = arith.constant 0 : i32
    %c0_i32_1 = arith.constant 0 : i32
    return %c0_i32, %c0_i32_0 : i32, i32
  }
  func.func @transform_3(%arg0: i32) -> (i32, i32) {
    %c0_i32 = arith.constant 0 : i32
    %c0_i32_0 = arith.constant 0 : i32
    return %arg0, %c0_i32 : i32, i32
  }
}

</mosaic_0001>

<llo_original>
// kernel: tpu_custom_call.1
$region0: #{tpu_custom_call.1}
  #allocation0 [shape = 'u32[]', space=smem, size = 0x4, offset = 0x4, fixed_abs, tag = 'smem constant byte address 0x4 - core index']
  #allocation1 [shape = 'u32[144,128]{1,0:T(1,128)}', space=vmem, size = 0x12000, scoped, tag = 'internal scratch']
  %s0 = inlined_call_operand.vmem [shape: f32[16,128], index: 0, kind: input, shape index: {}]
  %s1 = inlined_call_operand.vmem [shape: f32[128,8], index: 1, kind: input, shape index: {}]
  %s2 = inlined_call_operand.vmem [shape: f32[8,128], index: 2, kind: input, shape index: {}]
  %s3 = inlined_call_operand.hbm [shape: f32[16,128], index: 3, kind: output, shape index: {}]
  %s4 = sld [smem:[#allocation0]]
  $region45: #{tpu_custom_call.1} parent=0
    _
  %s6 = ssub.s32 1, %s4
  %s7 = scalar_select 0, %s6, %s4
  $region1: #{tpu_custom_call.1} parent=0
    #allocation2 [shape = 'u8[8192]{0}', space=vmem, size = 0x2000, scoped, tag = 'output window, operand 0']
    #allocation3 [shape = 's32[2]{0}', space=sflag, size = 0x8, scoped, tag = 'scoped memory for tpu_custom_call.1']
    %8 = vsyncpa [#allocation3], 0
    %s9 = scalar_lea.sflag [#allocation3], 1
    %10 = vsyncpa %s9, 0
    loop: start=0, step=1, limit=4
    $region2: #{tpu_custom_call.1} parent=1 // loop_pre_header
      _
    $region3: #{tpu_custom_call.1} parent=1 // loop_header
      %s12 = sphi 0, %s16
      %p13 = scmp.ge.s32.totalorder %s12, 4
      %s22 = sphi 0, %s24
      %s25 = sphi 0, %s22
      %s26 = sphi 0, %s25
      %s42 = sphi 0, %s26
      %s46 = sphi 0, %s46
      %s48 = sphi 0, %s46
      %s49 = sphi 0, %s48
      %s63 = sphi 0, %s49
      %s67 = sphi 0, %s67
      %s69 = sphi 0, %s67
      %s70 = sphi 0, %s69
      %s84 = sphi 0, %s70
      %s90 = sphi 0, %s92
      %s93 = sphi 0, %s90
      %s94 = sphi 0, %s93
      %s110 = sphi 0, %s94
    $region4: #{tpu_custom_call.1} parent=1 // loop_header_branch
      %15 = sbr.rel (%p13) target = $region8
    $region5: #{tpu_custom_call.1} parent=1 // loop_body
      %s17 = ssub.s32 %s12, 1
      %s18 = ssub.s32 %s12, 2
      %s19 = sadd.s32 %s12, 1
      %s20 = ssub.s32 %s12, %s19
      %p21 = scmp.eq.s32.totalorder %s20, 0
      %s23 = sadd.s32 %s22, 1
      %s24 = scalar_select %p21, %s22, %s23
      %p27 = pneg %p21
      %p28 = scmp.eq.s32.totalorder %s12, 1
      %p29 = por %p27, %p28
      %p30 = scmp.ne.s32.totalorder %s22, %s25
      %p31 = scmp.eq.s32.totalorder %s12, 0
      %p32 = por %p30, %p31
      %p33 = scmp.ne.s32.totalorder %s22, %s25
      %p34 = scmp.eq.s32.totalorder %s17, 1
      %p35 = por %p33, %p34
      %p36 = scmp.ne.s32.totalorder %s25, %s26
      %p37 = scmp.eq.s32.totalorder %s17, 0
      %p38 = por %p36, %p37
      %p39 = scmp.ne.s32.totalorder %s25, %s26
      %p40 = scmp.eq.s32.totalorder %s18, 1
      %p41 = por %p39, %p40
      %p43 = scmp.ne.s32.totalorder %s26, %s42
      %p44 = scmp.eq.s32.totalorder %s18, 0
      %p45 = por %p43, %p44
      %s47 = sadd.s32 %s46, 1
      %p50 = scmp.eq.s32.totalorder %s12, 1
      %p51 = scmp.ne.s32.totalorder %s46, %s48
      %p52 = scmp.eq.s32.totalorder %s12, 0
      %p53 = por %p51, %p52
      %p54 = scmp.ne.s32.totalorder %s46, %s48
      %p55 = scmp.eq.s32.totalorder %s17, 1
      %p56 = por %p54, %p55
      %p57 = scmp.ne.s32.totalorder %s48, %s49
      %p58 = scmp.eq.s32.totalorder %s17, 0
      %p59 = por %p57, %p58
      %p60 = scmp.ne.s32.totalorder %s48, %s49
      %p61 = scmp.eq.s32.totalorder %s18, 1
      %p62 = por %p60, %p61
      %p64 = scmp.ne.s32.totalorder %s49, %s63
      %p65 = scmp.eq.s32.totalorder %s18, 0
      %p66 = por %p64, %p65
      %s68 = sadd.s32 %s67, 1
      %p71 = scmp.eq.s32.totalorder %s12, 1
      %p72 = scmp.ne.s32.totalorder %s67, %s69
      %p73 = scmp.eq.s32.totalorder %s12, 0
      %p74 = por %p72, %p73
      %p75 = scmp.ne.s32.totalorder %s67, %s69
      %p76 = scmp.eq.s32.totalorder %s17, 1
      %p77 = por %p75, %p76
      %p78 = scmp.ne.s32.totalorder %s69, %s70
      %p79 = scmp.eq.s32.totalorder %s17, 0
      %p80 = por %p78, %p79
      %p81 = scmp.ne.s32.totalorder %s69, %s70
      %p82 = scmp.eq.s32.totalorder %s18, 1
      %p83 = por %p81, %p82
      %p85 = scmp.ne.s32.totalorder %s70, %s84
      %p86 = scmp.eq.s32.totalorder %s18, 0
      %p87 = por %p85, %p86
      %s88 = ssub.s32 %s12, %s19
      %p89 = scmp.eq.s32.totalorder %s88, 0
      %s91 = sadd.s32 %s90, 1
      %s92 = scalar_select %p89, %s90, %s91
      %p95 = pneg %p89
      %p96 = scmp.eq.s32.totalorder %s12, 1
      %p97 = por %p95, %p96
      %p98 = scmp.ne.s32.totalorder %s90, %s93
      %p99 = scmp.eq.s32.totalorder %s12, 0
      %p100 = por %p98, %p99
      %p101 = scmp.ne.s32.totalorder %s90, %s93
      %p102 = scmp.eq.s32.totalorder %s17, 1
      %p103 = por %p101, %p102
      %p104 = scmp.ne.s32.totalorder %s93, %s94
      %p105 = scmp.eq.s32.totalorder %s17, 0
      %p106 = por %p104, %p105
      %p107 = scmp.ne.s32.totalorder %s93, %s94
      %p108 = scmp.eq.s32.totalorder %s18, 1
      %p109 = por %p107, %p108
      %p111 = scmp.ne.s32.totalorder %s94, %s110
      %p112 = scmp.eq.s32.totalorder %s18, 0
      %p113 = por %p111, %p112
      %p114 = scmp.le.s32.totalorder 1, %s12
      %p115 = scmp.lt.s32.totalorder %s12, 3
      %p116 = pnand %p114, %p115
      %p117 = pneg %p116
      // Predicated region
      $region9: #{tpu_custom_call.1} parent=5 // pred_check
        _
      $region10: #{tpu_custom_call.1} parent=5 // pred_check_branch
        %119 = sbr.rel (%p116) target = $region12
      $region11: #{tpu_custom_call.1} parent=5 // pred_region
        %s120 = ssub.s32 %s12, 1
        // Predicated region
        $region13: #{tpu_custom_call.1} parent=11 // pred_check
          %p121 = pneg %p59
        $region14: #{tpu_custom_call.1} parent=11 // pred_check_branch
          %123 = sbr.rel (%p121) target = $region16
        $region15: #{tpu_custom_call.1} parent=11 // pred_region
          _
        $region16: #{tpu_custom_call.1} parent=11 // pred_fallthru
          _
        // Predicated region
        $region17: #{tpu_custom_call.1} parent=11 // pred_check
          %p124 = pneg %p80
        $region18: #{tpu_custom_call.1} parent=11 // pred_check_branch
          %126 = sbr.rel (%p124) target = $region20
        $region19: #{tpu_custom_call.1} parent=11 // pred_region
          _
        $region20: #{tpu_custom_call.1} parent=11 // pred_fallthru
          _
      $region12: #{tpu_custom_call.1} parent=5 // pred_fallthru
        _
      %p127 = scmp.lt.s32.totalorder %s12, 2
      // Predicated region
      $region21: #{tpu_custom_call.1} parent=5 // pred_check
        %p128 = pneg %p127
      $region22: #{tpu_custom_call.1} parent=5 // pred_check_branch
        %130 = sbr.rel (%p128) target = $region24
      $region23: #{tpu_custom_call.1} parent=5 // pred_region
        // Predicated region
        $region25: #{tpu_custom_call.1} parent=23 // pred_check
          %p131 = pneg %p32
        $region26: #{tpu_custom_call.1} parent=23 // pred_check_branch
          %133 = sbr.rel (%p131) target = $region28
        $region27: #{tpu_custom_call.1} parent=23 // pred_region
          %p134 = scmp.lt.s32.totalorder %s12, 1
          %s135 = scalar_select %p134, %s12, 1
          %s136 = smul.addr %s135, 8
          %s137 = scalar_lea.vmem %s0, %s136
        $region28: #{tpu_custom_call.1} parent=23 // pred_fallthru
          _
      $region24: #{tpu_custom_call.1} parent=5 // pred_fallthru
        _
      %p138 = scmp.le.s32.totalorder 1, %s12
      %p139 = scmp.lt.s32.totalorder %s12, 3
      %p140 = pnand %p138, %p139
      %p141 = pneg %p140
      // Predicated region
      $region29: #{tpu_custom_call.1} parent=5 // pred_check
        _
      $region30: #{tpu_custom_call.1} parent=5 // pred_check_branch
        %143 = sbr.rel (%p140) target = $region32
      $region31: #{tpu_custom_call.1} parent=5 // pred_region
        %s144 = ssub.s32 %s12, 1
        %p145 = scmp.lt.s32.totalorder %s17, 1
        %s146 = scalar_select %p145, %s17, 1
        %s147 = smul.addr %s146, 8
        %s148 = scalar_lea.vmem %s0, %s147
        %p149 = pneg %p38
        %p150 = pneg %p35
        %p151 = pneg %p59
        %p152 = pneg %p56
        %p153 = pneg %p80
        %p154 = pneg %p77
        %p155 = pneg %p106
        %p156 = pneg %p103
        %s157 = sand.u32 %s93, 1
        %s158 = scalar_lea.sflag [#allocation3], %s157
        %s159 = sand.u32 %s93, 1
        %s160 = smul.addr %s159, 8
        %s161 = scalar_lea.vmem [#allocation2], %s160
        %p162 = scmp.lt.s32.totalorder %s17, 1
        %s163 = scalar_select %p162, %s17, 1
        %s164 = smul.addr %s163, 8
        %s165 = scalar_lea.vmem %s0, %s164
        %v166 = vld [vmem:[%s165] sm:$0xff]
        %v167 = vld [vmem:[%s1] sm:$0xff]
        %v168 = vld [vmem:[%s1 + $0x8] sm:$0xff]
        %v169 = vld [vmem:[%s1 + $0x10] sm:$0xff]
        %v170 = vld [vmem:[%s1 + $0x18] sm:$0xff]
        %v171 = vld [vmem:[%s1 + $0x20] sm:$0xff]
        %v172 = vld [vmem:[%s1 + $0x28] sm:$0xff]
        %v173 = vld [vmem:[%s1 + $0x30] sm:$0xff]
        %v174 = vld [vmem:[%s1 + $0x38] sm:$0xff]
        %v175 = vld [vmem:[%s1 + $0x40] sm:$0xff]
        %v176 = vld [vmem:[%s1 + $0x48] sm:$0xff]
        %v177 = vld [vmem:[%s1 + $0x50] sm:$0xff]
        %v178 = vld [vmem:[%s1 + $0x58] sm:$0xff]
        %v179 = vld [vmem:[%s1 + $0x60] sm:$0xff]
        %v180 = vld [vmem:[%s1 + $0x68] sm:$0xff]
        %v181 = vld [vmem:[%s1 + $0x70] sm:$0xff]
        %v182 = vld [vmem:[%s1 + $0x78] sm:$0xff]
        %183 = vmatprep.subr.mxu0 0.0
        %184 = vmatpush1.msra.mxu0 %v182
        %185 = vmatprep.subr.mxu0 0.0
        %186 = vmatpush1.msra.mxu0 %v181
        %187 = vmatprep.subr.mxu0 0.0
        %188 = vmatpush1.msra.mxu0 %v180
        %189 = vmatprep.subr.mxu0 0.0
        %190 = vmatpush1.msra.mxu0 %v179
        %191 = vmatprep.subr.mxu0 0.0
        %192 = vmatpush1.msra.mxu0 %v178
        %193 = vmatprep.subr.mxu0 0.0
        %194 = vmatpush1.msra.mxu0 %v177
        %195 = vmatprep.subr.mxu0 0.0
        %196 = vmatpush1.msra.mxu0 %v176
        %197 = vmatprep.subr.mxu0 0.0
        %198 = vmatpush1.msra.mxu0 %v175
        %199 = vmatprep.subr.mxu0 0.0
        %200 = vmatpush1.msra.mxu0 %v174
        %201 = vmatprep.subr.mxu0 0.0
        %202 = vmatpush1.msra.mxu0 %v173
        %203 = vmatprep.subr.mxu0 0.0
        %204 = vmatpush1.msra.mxu0 %v172
        %205 = vmatprep.subr.mxu0 0.0
        %206 = vmatpush1.msra.mxu0 %v171
        %207 = vmatprep.subr.mxu0 0.0
        %208 = vmatpush1.msra.mxu0 %v170
        %209 = vmatprep.subr.mxu0 0.0
        %210 = vmatpush1.msra.mxu0 %v169
        %211 = vmatprep.subr.mxu0 0.0
        %212 = vmatpush1.msra.mxu0 %v168
        %213 = vmatprep.subr.mxu0 0.0
        %214 = vmatpush1.msra.mxu0 %v167
        %215 = vmatprep.subr.mxu0 0.0
        %216 = vmatpush2.msra.mxu0 0.0
        %217 = vmatprep.subr.mxu0 0.0
        %218 = vmatpush2.msra.mxu0 0.0
        %219 = vmatprep.subr.mxu0 0.0
        %220 = vmatpush2.msra.mxu0 0.0
        %221 = vmatprep.subr.mxu0 0.0
        %222 = vmatpush2.msra.mxu0 0.0
        %223 = vmatprep.subr.mxu0 0.0
        %224 = vmatpush2.msra.mxu0 0.0
        %225 = vmatprep.subr.mxu0 0.0
        %226 = vmatpush2.msra.mxu0 0.0
        %227 = vmatprep.subr.mxu0 0.0
        %228 = vmatpush2.msra.mxu0 0.0
        %229 = vmatprep.subr.mxu0 0.0
        %230 = vmatpush2.msra.mxu0 0.0
        %231 = vmatprep.subr.mxu0 0.0
        %232 = vmatpush2.msra.mxu0 0.0
        %233 = vmatprep.subr.mxu0 0.0
        %234 = vmatpush2.msra.mxu0 0.0
        %235 = vmatprep.subr.mxu0 0.0
        %236 = vmatpush2.msra.mxu0 0.0
        %237 = vmatprep.subr.mxu0 0.0
        %238 = vmatpush2.msra.mxu0 0.0
        %239 = vmatprep.subr.mxu0 0.0
        %240 = vmatpush2.msra.mxu0 0.0
        %241 = vmatprep.subr.mxu0 0.0
        %242 = vmatpush2.msra.mxu0 0.0
        %243 = vmatprep.subr.mxu0 0.0
        %244 = vmatpush2.msra.mxu0 0.0
        %245 = vmatprep.subr.mxu0 0.0
        %246 = vmatpush2.msra.mxu0 0.0
        %247 = vmatprep.mubr.f32.mxu0 0.0
        %248 = vmatmul.mubr.f32.gmra.mxu0 %v166
        %v249 = vpop.f32.mrf.mxu0
        %v250 = vadd.f32 0.0, %v249
        %v251 = vpop.f32.mrf.mxu0
        %252 = vdwg.mxu0
        %v253 = vmul.f32 %v166, %v166
        %254 = vmatprep.subr.mxu0 0.0
        %255 = vmatpush1.msra.mxu0 %v182
        %256 = vmatprep.subr.mxu0 0.0
        %257 = vmatpush1.msra.mxu0 %v181
        %258 = vmatprep.subr.mxu0 0.0
        %259 = vmatpush1.msra.mxu0 %v180
        %260 = vmatprep.subr.mxu0 0.0
        %261 = vmatpush1.msra.mxu0 %v179
        %262 = vmatprep.subr.mxu0 0.0
        %263 = vmatpush1.msra.mxu0 %v178
        %264 = vmatprep.subr.mxu0 0.0
        %265 = vmatpush1.msra.mxu0 %v177
        %266 = vmatprep.subr.mxu0 0.0
        %267 = vmatpush1.msra.mxu0 %v176
        %268 = vmatprep.subr.mxu0 0.0
        %269 = vmatpush1.msra.mxu0 %v175
        %270 = vmatprep.subr.mxu0 0.0
        %271 = vmatpush1.msra.mxu0 %v174
        %272 = vmatprep.subr.mxu0 0.0
        %273 = vmatpush1.msra.mxu0 %v173
        %274 = vmatprep.subr.mxu0 0.0
        %275 = vmatpush1.msra.mxu0 %v172
        %276 = vmatprep.subr.mxu0 0.0
        %277 = vmatpush1.msra.mxu0 %v171
        %278 = vmatprep.subr.mxu0 0.0
        %279 = vmatpush1.msra.mxu0 %v170
        %280 = vmatprep.subr.mxu0 0.0
        %281 = vmatpush1.msra.mxu0 %v169
        %282 = vmatprep.subr.mxu0 0.0
        %283 = vmatpush1.msra.mxu0 %v168
        %284 = vmatprep.subr.mxu0 0.0
        %285 = vmatpush1.msra.mxu0 %v167
        %286 = vmatprep.subr.mxu0 0.0
        %287 = vmatpush2.msra.mxu0 0.0
        %288 = vmatprep.subr.mxu0 0.0
        %289 = vmatpush2.msra.mxu0 0.0
        %290 = vmatprep.subr.mxu0 0.0
        %291 = vmatpush2.msra.mxu0 0.0
        %292 = vmatprep.subr.mxu0 0.0
        %293 = vmatpush2.msra.mxu0 0.0
        %294 = vmatprep.subr.mxu0 0.0
        %295 = vmatpush2.msra.mxu0 0.0
        %296 = vmatprep.subr.mxu0 0.0
        %297 = vmatpush2.msra.mxu0 0.0
        %298 = vmatprep.subr.mxu0 0.0
        %299 = vmatpush2.msra.mxu0 0.0
        %300 = vmatprep.subr.mxu0 0.0
        %301 = vmatpush2.msra.mxu0 0.0
        %302 = vmatprep.subr.mxu0 0.0
        %303 = vmatpush2.msra.mxu0 0.0
        %304 = vmatprep.subr.mxu0 0.0
        %305 = vmatpush2.msra.mxu0 0.0
        %306 = vmatprep.subr.mxu0 0.0
        %307 = vmatpush2.msra.mxu0 0.0
        %308 = vmatprep.subr.mxu0 0.0
        %309 = vmatpush2.msra.mxu0 0.0
        %310 = vmatprep.subr.mxu0 0.0
        %311 = vmatpush2.msra.mxu0 0.0
        %312 = vmatprep.subr.mxu0 0.0
        %313 = vmatpush2.msra.mxu0 0.0
        %314 = vmatprep.subr.mxu0 0.0
        %315 = vmatpush2.msra.mxu0 0.0
        %316 = vmatprep.subr.mxu0 0.0
        %317 = vmatpush2.msra.mxu0 0.0
        %318 = vmatprep.mubr.f32.mxu0 0.0
        %319 = vmatmul.mubr.f32.gmra.mxu0 %v253
        %v320 = vpop.f32.mrf.mxu0
        %v321 = vadd.f32 0.0, %v320
        %v322 = vpop.f32.mrf.mxu0
        %323 = vdwg.mxu0
        %v324 = vmul.f32 %v250, %v250
        %v325 = vsub.f32 %v321, %v324
        %v326 = vmax.f32 %v325, 0.0
        %v327 = vadd.f32 %v326, 1e-05
        %v328 = vrsqrt.pop %v327
        %v329 = vld [vmem:[%s2] sm:$0xff]
        %vm330 = vcmask 64512
        %v332 = vsel %vm330, %v328, 0
        %334 = vmatprep.subr.mxu0 0.0
        %335 = vmatpush1.msra.mxu0 0.0
        %336 = vmatprep.subr.mxu0 0.0
        %337 = vmatpush1.msra.mxu0 0.0
        %338 = vmatprep.subr.mxu0 0.0
        %339 = vmatpush1.msra.mxu0 0.0
        %340 = vmatprep.subr.mxu0 0.0
        %341 = vmatpush1.msra.mxu0 0.0
        %342 = vmatprep.subr.mxu0 0.0
        %343 = vmatpush1.msra.mxu0 0.0
        %344 = vmatprep.subr.mxu0 0.0
        %345 = vmatpush1.msra.mxu0 0.0
        %346 = vmatprep.subr.mxu0 0.0
        %347 = vmatpush1.msra.mxu0 0.0
        %348 = vmatprep.subr.mxu0 0.0
        %349 = vmatpush1.msra.mxu0 0.0
        %350 = vmatprep.subr.mxu0 0.0
        %351 = vmatpush1.msra.mxu0 0.0
        %352 = vmatprep.subr.mxu0 0.0
        %353 = vmatpush1.msra.mxu0 0.0
        %354 = vmatprep.subr.mxu0 0.0
        %355 = vmatpush1.msra.mxu0 0.0
        %356 = vmatprep.subr.mxu0 0.0
        %357 = vmatpush1.msra.mxu0 0.0
        %358 = vmatprep.subr.mxu0 0.0
        %359 = vmatpush1.msra.mxu0 0.0
        %360 = vmatprep.subr.mxu0 0.0
        %361 = vmatpush1.msra.mxu0 0.0
        %362 = vmatprep.subr.mxu0 0.0
        %363 = vmatpush1.msra.mxu0 0.0
        %364 = vmatprep.subr.mxu0 0.0
        %365 = vmatpush1.msra.mxu0 %v329
        %366 = vmatprep.subr.mxu0 0.0
        %367 = vmatpush2.msra.mxu0 0.0
        %368 = vmatprep.subr.mxu0 0.0
        %369 = vmatpush2.msra.mxu0 0.0
        %370 = vmatprep.subr.mxu0 0.0
        %371 = vmatpush2.msra.mxu0 0.0
        %372 = vmatprep.subr.mxu0 0.0
        %373 = vmatpush2.msra.mxu0 0.0
        %374 = vmatprep.subr.mxu0 0.0
        %375 = vmatpush2.msra.mxu0 0.0
        %376 = vmatprep.subr.mxu0 0.0
        %377 = vmatpush2.msra.mxu0 0.0
        %378 = vmatprep.subr.mxu0 0.0
        %379 = vmatpush2.msra.mxu0 0.0
        %380 = vmatprep.subr.mxu0 0.0
        %381 = vmatpush2.msra.mxu0 0.0
        %382 = vmatprep.subr.mxu0 0.0
        %383 = vmatpush2.msra.mxu0 0.0
        %384 = vmatprep.subr.mxu0 0.0
        %385 = vmatpush2.msra.mxu0 0.0
        %386 = vmatprep.subr.mxu0 0.0
        %387 = vmatpush2.msra.mxu0 0.0
        %388 = vmatprep.subr.mxu0 0.0
        %389 = vmatpush2.msra.mxu0 0.0
        %390 = vmatprep.subr.mxu0 0.0
        %391 = vmatpush2.msra.mxu0 0.0
        %392 = vmatprep.subr.mxu0 0.0
        %393 = vmatpush2.msra.mxu0 0.0
        %394 = vmatprep.subr.mxu0 0.0
        %395 = vmatpush2.msra.mxu0 0.0
        %396 = vmatprep.subr.mxu0 0.0
        %397 = vmatpush2.msra.mxu0 0.0
        %398 = vmatprep.mubr.f32.mxu0 0.0
        %399 = vmatmul.mubr.f32.gmra.mxu0 %v332
        %v400 = vpop.f32.mrf.mxu0
        %v401 = vadd.f32 0.0, %v400
        %v402 = vpop.f32.mrf.mxu0
        %403 = vdwg.mxu0
        %v404 = vmul.f32 %v166, %v401
        %405 = vst [vmem:[%s161] sm:$0xff] %v404
        %s406 = sand.u32 %s93, 1
        %s407 = scalar_lea.sflag [#allocation3], %s406
        %s408 = sand.u32 %s93, 1
        %s409 = smul.addr %s408, 8
        %s410 = scalar_lea.vmem [#allocation2], %s409
        // Predicated region
        $region33: #{tpu_custom_call.1} parent=31 // pred_check
          %p411 = pneg %p103
        $region34: #{tpu_custom_call.1} parent=31 // pred_check_branch
          %413 = sbr.rel (%p411) target = $region36
        $region35: #{tpu_custom_call.1} parent=31 // pred_region
          %s415 = ssub.s32 128, 128
          %416 = vsyncadd %s407, %s415
          %s417 = smul.addr %s17, 128
          %s418 = scalar_lea.hbm %s3, %s417
          %s420 = sshll.u32 %s410, 4
          %s421 = int_to_ptr.vmem [resolvable:$true] %s420
          %423 = dma.vmem_to_hbm [thread:$0]  %s421, 128, %s418, %s407
        $region36: #{tpu_custom_call.1} parent=31 // pred_fallthru
          _
      $region32: #{tpu_custom_call.1} parent=5 // pred_fallthru
        _
      %p424 = scmp.le.s32.totalorder 2, %s12
      // Predicated region
      $region37: #{tpu_custom_call.1} parent=5 // pred_check
        %p425 = pneg %p424
      $region38: #{tpu_custom_call.1} parent=5 // pred_check_branch
        %427 = sbr.rel (%p425) target = $region40
      $region39: #{tpu_custom_call.1} parent=5 // pred_region
        %s428 = ssub.s32 %s12, 2
        // Predicated region
        $region41: #{tpu_custom_call.1} parent=39 // pred_check
          %p429 = pneg %p109
        $region42: #{tpu_custom_call.1} parent=39 // pred_check_branch
          %431 = sbr.rel (%p429) target = $region44
        $region43: #{tpu_custom_call.1} parent=39 // pred_region
          %s432 = sand.u32 %s94, 1
          %s433 = scalar_lea.sflag [#allocation3], %s432
          %s434 = sand.u32 %s94, 1
          %s435 = smul.addr %s434, 8
          %s436 = scalar_lea.vmem [#allocation2], %s435
          %437 = dma.done %s433, 128
        $region44: #{tpu_custom_call.1} parent=39 // pred_fallthru
          _
      $region40: #{tpu_custom_call.1} parent=5 // pred_fallthru
        _
    $region6: #{tpu_custom_call.1} parent=1 // loop_footer
      %s16 = sadd.s32 1, %s12
    $region7: #{tpu_custom_call.1} parent=1 // loop_footer_branch
      %11 = sbr.rel target = $region3
    $region8: #{tpu_custom_call.1} parent=1 // loop_exit
      _
    %438 = vsyncpa [#allocation3], 1
    %s439 = scalar_lea.sflag [#allocation3], 1
    %440 = vsyncpa %s439, 1

</llo_original>
